<compile_context>
chip_gen: v6e
topology: v6e:2x2x1
jax: 0.10.0
libtpu: 0.0.40
codegen_flags: <defaults>
</compile_context>

<pallas_src>
import jax
import jax.numpy as jnp
from jax.experimental import pallas as pl
from jax.experimental.pallas import tpu as pltpu


def _identity_kernel(x_ref, o_ref):
    # Pure parameter passthrough on the scalar (SMEM) path: sld -> sst.
    o_ref[0] = x_ref[0]


def _pallas_identity(x_param: jax.Array) -> jax.Array:
    return pl.pallas_call(
        _identity_kernel,
        out_shape=jax.ShapeDtypeStruct((1,), x_param.dtype),
        in_specs=[pl.BlockSpec(memory_space=pltpu.MemorySpace.SMEM)],
        out_specs=pl.BlockSpec(memory_space=pltpu.MemorySpace.SMEM),
    )(x_param)


# --- differentiable public forward (identity VJP) ---------------------------

@jax.custom_vjp
def _simple_strategy_forward_impl(x_param: jax.Array) -> jax.Array:
    return _pallas_identity(x_param)


def _fwd(x_param):
    return _pallas_identity(x_param), None


def _bwd(_, g):
    return (g,)


_simple_strategy_forward_impl.defvjp(_fwd, _bwd)

# jit at the call boundary so eager callers don't pay tracing/dispatch per call.
simple_strategy_forward = jax.jit(_simple_strategy_forward_impl)


def simple_strategy_forward_reference(x_param: jax.Array) -> jax.Array:
    """Recommended production path: forward is a no-op, return the parameter."""
    return x_param


if __name__ == "__main__":
    # Deterministic parameter init (SimpleStrategy.__init__ takes a float x).
    key = jax.random.PRNGKey(0)
    x_init = jax.random.uniform(key, (1,), dtype=jnp.float32)  # the Parameter
    expected = float(x_init[0])

    # Forward through the Pallas kernel.
    out = simple_strategy_forward(x_init)
    out = jax.block_until_ready(out)

    assert out.shape == (1,)
    assert out.dtype == jnp.float32
    assert abs(float(out[0]) - expected) < 1e-7

    # Gradients flow through the custom_vjp identity (d out / d param == 1).
    g = jax.grad(lambda p: _simple_strategy_forward_impl(p)[0])(x_init)
    g = jax.block_until_ready(g)
    assert abs(float(g[0]) - 1.0) < 1e-7

    # Reference (kernel-free) path agrees as well.
    ref = simple_strategy_forward_reference(x_init)
    assert abs(float(ref[0]) - expected) < 1e-7

    print("KERNEL_OK")
</pallas_src>

<mosaic_0001>
module attributes {stable_mosaic.version = 11 : i64} {
  func.func @_identity_kernel(%arg0: memref<1xf32, #tpu.memory_space<smem>>, %arg1: memref<1xf32, #tpu.memory_space<smem>>) attributes {dimension_semantics = [], scalar_prefetch = 0 : i64, scratch_operands = 0 : i64, tpu.core_type = #tpu.core_type<tc>} {
    %c0 = arith.constant 0 : index
    %0 = memref.load %arg0[%c0] : memref<1xf32, #tpu.memory_space<smem>>
    %c0_0 = arith.constant 0 : index
    %1 = memref.load %arg1[%c0_0] : memref<1xf32, #tpu.memory_space<smem>>
    memref.store %0, %arg1[%c0_0] : memref<1xf32, #tpu.memory_space<smem>>
    return
  }
}

</mosaic_0001>

<llo_original>
// kernel: _simple_strategy_forward_impl.1
$region0: #{_simple_strategy_forward_impl.1}
  #allocation0 [shape = 'u32[]', space=smem, size = 0x4, offset = 0x4, fixed_abs, tag = 'smem constant byte address 0x4 - core index']
  #allocation1 [shape = 'u32[144,128]{1,0:T(1,128)}', space=vmem, size = 0x12000, scoped, tag = 'internal scratch']
  #allocation2 [shape = 'f32[1]{0:T(128)S(6)}', space=smem, size = 0x200, scoped, tag = 'scoped memory for _simple_strategy_forward_impl.1']
  %s0 = inlined_call_operand.<no memory space> [shape: f32[1], index: 0, kind: input, shape index: {}]
  %s1 = inlined_call_operand.hbm [shape: f32[1], index: 1, kind: output, shape index: {}]
  %s2 = sld [smem:[#allocation0]]
  $region14: #{_simple_strategy_forward_impl.1} parent=0
    _
  %s4 = ssub.s32 1, %s2
  %s5 = scalar_select 0, %s4, %s2
  %6 = sst [smem:[#allocation2]] %s0
  $region1: #{_simple_strategy_forward_impl.1} parent=0
    #allocation3 [shape = 'u8[512]{0}', space=smem, size = 0x200, scoped, tag = 'output window, operand 0, single buffered']
    #allocation4 [shape = 's32[1]{0}', space=sflag, size = 0x4, scoped, tag = 'scoped memory for _simple_strategy_forward_impl.1']
    %7 = vsyncpa [#allocation4], 0
    // Predicated region
    $region2: #{_simple_strategy_forward_impl.1} parent=1 // pred_check
      _
    $region3: #{_simple_strategy_forward_impl.1} parent=1 // pred_check_branch
      %9 = sbr.rel (0) target = $region5
    $region4: #{_simple_strategy_forward_impl.1} parent=1 // pred_region
      _
    $region5: #{_simple_strategy_forward_impl.1} parent=1 // pred_fallthru
      _
    %s10 = sld [smem:[#allocation2]]
    %s11 = scalar_lea.smem [#allocation3], 0
    %12 = sst [smem:[%s11]] %s10
    // Predicated region
    $region6: #{_simple_strategy_forward_impl.1} parent=1 // pred_check
      _
    $region7: #{_simple_strategy_forward_impl.1} parent=1 // pred_check_branch
      %14 = sbr.rel (0) target = $region9
    $region8: #{_simple_strategy_forward_impl.1} parent=1 // pred_region
      %s16 = ssub.s32 16, 16
      %17 = vsyncadd [#allocation4], %s16
      %20 = dma.smem_to_hbm [#allocation3], 16, %s1, [#allocation4]
    $region9: #{_simple_strategy_forward_impl.1} parent=1 // pred_fallthru
      _
    // Predicated region
    $region10: #{_simple_strategy_forward_impl.1} parent=1 // pred_check
      _
    $region11: #{_simple_strategy_forward_impl.1} parent=1 // pred_check_branch
      %22 = sbr.rel (0) target = $region13
    $region12: #{_simple_strategy_forward_impl.1} parent=1 // pred_region
      %23 = dma.done [#allocation4], 16
    $region13: #{_simple_strategy_forward_impl.1} parent=1 // pred_fallthru
      _
    %24 = sfence
    %25 = vsyncpa [#allocation4], 1

</llo_original>
